<compile_context>
chip_gen: v6e
topology: v6e:2x2x1
jax: 0.10.0
libtpu: 0.0.40
codegen_flags: <defaults>
</compile_context>

<pallas_src>
import math
import functools

import jax
import jax.numpy as jnp
from jax.experimental import pallas as pl
from jax.experimental.pallas import tpu as pltpu

_LANE = 128


def _dma_copy_kernel(x_hbm, o_hbm, sem):
    # Single HBM->HBM DMA: no VMEM staging, no vreg load/store work, no grid.
    cp = pltpu.make_async_copy(x_hbm, o_hbm, sem)
    cp.start()
    cp.wait()


def _resolve_shape(shape, total):
    """torch-style reshape target: supports a single -1 dimension."""
    shape = tuple(int(s) for s in shape)
    if shape.count(-1) > 1:
        raise ValueError("only one -1 dimension allowed")
    if -1 in shape:
        idx = shape.index(-1)
        known = math.prod(s for j, s in enumerate(shape) if j != idx)
        if known == 0 or total % known:
            raise ValueError(f"cannot reshape {total} elements into {shape}")
        shape = shape[:idx] + (total // known,) + shape[idx + 1:]
    if math.prod(shape) != total:
        raise ValueError(f"cannot reshape {total} elements into {shape}")
    return shape


@functools.partial(jax.jit, static_argnums=1)
def _reshape_copy(x, target_shape):
    total = x.size
    # Present the data as a lane-dense (rows, 128) slab when the size allows it
    # (a metadata-only view), otherwise a plain 1-D buffer — the DMA engine copies
    # either at full HBM bandwidth, and no padding / slicing passes are needed.
    if total % _LANE == 0:
        slab_shape = (total // _LANE, _LANE)
    else:
        slab_shape = (total,)
    slab = x.reshape(slab_shape)          # metadata-only for a contiguous input

    out = pl.pallas_call(
        _dma_copy_kernel,
        out_shape=jax.ShapeDtypeStruct(slab_shape, x.dtype),
        in_specs=[pl.BlockSpec(memory_space=pl.ANY)],
        out_specs=pl.BlockSpec(memory_space=pl.ANY),
        scratch_shapes=[pltpu.SemaphoreType.DMA],
    )(slab)

    return out.reshape(target_shape)      # metadata-only


def reshape_net(x, shape, use_pallas_copy=True):
    """Pallas equivalent of reshapeNet(shape).forward(x) == x.reshape(shape)."""
    target = _resolve_shape(shape, x.size)
    if not use_pallas_copy or x.size == 0:
        # Zero-element guard + opt-in metadata-only fast path (no HBM traffic at all).
        return jnp.reshape(x, target)
    return _reshape_copy(x, target)


if __name__ == "__main__":
    key = jax.random.PRNGKey(0)
    x = jax.random.normal(key, (2, 4, 16, 16), jnp.float32)

    # Primary case: the shape stored by reshapeNet at construction time.
    target = (2, 64, 16)
    out = jax.block_until_ready(reshape_net(x, target))
    ref = jnp.reshape(x, target)
    assert out.shape == ref.shape and out.dtype == ref.dtype
    assert bool(jnp.all(out == ref)), "reshape output mismatch"

    # torch-style -1 inference + a total not divisible by 128 (exercises the 1-D DMA
    # path — no pad, no slice, still a single HBM->HBM copy).
    x2 = x[:, :3, :, :15]                       # 2*3*16*15 = 1440 elements
    out2 = jax.block_until_ready(reshape_net(x2, (-1, 15)))
    ref2 = jnp.reshape(x2, (-1, 15))
    assert out2.shape == ref2.shape
    assert bool(jnp.all(out2 == ref2)), "reshape output mismatch (ragged path)"

    # Zero-element guard (metadata-only fallback; no kernel launch).
    x3 = x[:, :0]
    out3 = reshape_net(x3, (0, 16, 16))
    assert out3.shape == (0, 16, 16)

    # Opt-in metadata-only fast path.
    out4 = reshape_net(x, target, use_pallas_copy=False)
    assert bool(jnp.all(out4 == ref))

    print("KERNEL_OK")
</pallas_src>

<mosaic_0001>
module attributes {stable_mosaic.version = 11 : i64} {
  func.func @_dma_copy_kernel(%arg0: memref<16x128xf32, #tpu.memory_space<any>>, %arg1: memref<16x128xf32, #tpu.memory_space<any>>, %arg2: memref<!tpu.dma_semaphore, #tpu.memory_space<semaphore_mem>>) attributes {dimension_semantics = [], scalar_prefetch = 0 : i64, scratch_operands = 1 : i64, tpu.core_type = #tpu.core_type<tc>} {
    tpu.enqueue_dma source(%arg0 : memref<16x128xf32, #tpu.memory_space<any>>) target(%arg1 : memref<16x128xf32, #tpu.memory_space<any>>) target_semaphore(%arg2 : memref<!tpu.dma_semaphore, #tpu.memory_space<semaphore_mem>>)
    tpu.wait_dma2 semaphore(%arg2 : memref<!tpu.dma_semaphore, #tpu.memory_space<semaphore_mem>>) src(%arg0 : memref<16x128xf32, #tpu.memory_space<any>>) dst(%arg1 : memref<16x128xf32, #tpu.memory_space<any>>)
    return
  }
}

</mosaic_0001>

<llo_original>
// kernel: _reshape_copy.1
$region0: #{_reshape_copy.1}
  #allocation0 [shape = 'u32[]', space=smem, size = 0x4, offset = 0x4, fixed_abs, tag = 'smem constant byte address 0x4 - core index']
  #allocation1 [shape = 'u32[144,128]{1,0:T(1,128)}', space=vmem, size = 0x12000, scoped, tag = 'internal scratch']
  #allocation2 [shape = 's32[1]{0}', space=sflag, size = 0x4, scoped, tag = 'scratch operand']
  #allocation3 [shape = 's32[]', space=sflag, size = 0x4, offset = 0, fixed_abs, tag = 'sflag constant byte address 0x0 - dummy sync flag']
  %s0 = inlined_call_operand.vmem [shape: f32[16,128], index: 0, kind: input, shape index: {}]
  %s1 = inlined_call_operand.vmem [shape: f32[16,128], index: 1, kind: output, shape index: {}]
  %s2 = sld [smem:[#allocation0]]
  $region36: #{_reshape_copy.1} parent=0
    _
  %s4 = ssub.s32 1, %s2
  %s5 = scalar_select 0, %s4, %s2
  %p7 = scmp.lt.u32.totalorder 16, 8
  %p8 = pneg %p7
  // Predicated region
  $region2: #{_reshape_copy.1} parent=0 // pred_check
    _
  $region3: #{_reshape_copy.1} parent=0 // pred_check_branch
    %10 = sbr.rel (%p7) target = $region5
  $region4: #{_reshape_copy.1} parent=0 // pred_region
    %s26 = sand.u32 16, 7
    %p27 = scmp.eq.s32.totalorder %s26, 0
    // Predicated region
    $region17: #{_reshape_copy.1} parent=4 // pred_check
      %p28 = pneg %p27
    $region18: #{_reshape_copy.1} parent=4 // pred_check_branch
      %30 = sbr.rel (%p28) target = $region20
    $region19: #{_reshape_copy.1} parent=4 // pred_region
      loop: start=0, step=1, limit=1
      $region21: #{_reshape_copy.1} parent=19 // loop_pre_header
        _
      $region22: #{_reshape_copy.1} parent=19 // loop_header
        %s32 = sphi 0, %s36
        %p33 = scmp.ge.s32.totalorder %s32, 1
        %s37 = sphi %s0, %s0
        %s38 = sphi %s1, %s1
      $region23: #{_reshape_copy.1} parent=19 // loop_header_branch
        %35 = sbr.rel (%p33) target = $region27
      $region24: #{_reshape_copy.1} parent=19 // loop_body
        %v39 = vld [vmem:[%s37] sm:$0xff]
        %40 = vst [vmem:[%s38] sm:$0xff] %v39
        %v41 = vld [vmem:[%s37 + $0x8] sm:$0xff]
        %42 = vst [vmem:[%s38 + $0x8] sm:$0xff] %v41
      $region25: #{_reshape_copy.1} parent=19 // loop_footer
        %s36 = sadd.s32 1, %s32
      $region26: #{_reshape_copy.1} parent=19 // loop_footer_branch
        %31 = sbr.rel target = $region22
      $region27: #{_reshape_copy.1} parent=19 // loop_exit
        _
    $region20: #{_reshape_copy.1} parent=4 // pred_fallthru
      _
    %p43 = pneg %p27
    // Predicated region
    $region28: #{_reshape_copy.1} parent=4 // pred_check
      _
    $region29: #{_reshape_copy.1} parent=4 // pred_check_branch
      %45 = sbr.rel (%p27) target = $region31
    $region30: #{_reshape_copy.1} parent=4 // pred_region
      %s46 = sand.u32 16, 7
    $region31: #{_reshape_copy.1} parent=4 // pred_fallthru
      _
  $region5: #{_reshape_copy.1} parent=0 // pred_fallthru
    _
  // Predicated region
  $region6: #{_reshape_copy.1} parent=0 // pred_check
    %p11 = pneg %p7
  $region7: #{_reshape_copy.1} parent=0 // pred_check_branch
    %13 = sbr.rel (%p11) target = $region9
  $region8: #{_reshape_copy.1} parent=0 // pred_region
    %s14 = sshll.u32 1, 16
    %s15 = ssub.s32 %s14, 1
    loop: start=0, step=1, limit=1
    $region10: #{_reshape_copy.1} parent=8 // loop_pre_header
      _
    $region11: #{_reshape_copy.1} parent=8 // loop_header
      %s17 = sphi 0, %s21
      %p18 = scmp.ge.s32.totalorder %s17, 1
      %s22 = sphi %s0, %s0
      %s23 = sphi %s1, %s1
    $region12: #{_reshape_copy.1} parent=8 // loop_header_branch
      %20 = sbr.rel (%p18) target = $region16
    $region13: #{_reshape_copy.1} parent=8 // loop_body
      %v24 = vld [vmem:[%s22] sm:%s15]
      %25 = vst [vmem:[%s23] sm:%s15] %v24
    $region14: #{_reshape_copy.1} parent=8 // loop_footer
      %s21 = sadd.s32 1, %s17
    $region15: #{_reshape_copy.1} parent=8 // loop_footer_branch
      %16 = sbr.rel target = $region11
    $region16: #{_reshape_copy.1} parent=8 // loop_exit
      _
  $region9: #{_reshape_copy.1} parent=0 // pred_fallthru
    _
  // Predicated region
  $region32: #{_reshape_copy.1} parent=0 // pred_check
    _
  $region33: #{_reshape_copy.1} parent=0 // pred_check_branch
    %49 = sbr.rel (0) target = $region35
  $region34: #{_reshape_copy.1} parent=0 // pred_region
    %50 = vsyncadd [#allocation2], 256
  $region35: #{_reshape_copy.1} parent=0 // pred_fallthru
    _
  %s51 = smul.u32 16, 1
  %s52 = sshll.u32 %s51, 4
  %53 = dma.done [#allocation2], %s52
  %54 = vsyncmov [#allocation2]
  %s55 = vpop.sfrf %54
  %p56 = scmp.eq.s32.totalorder %s55, 0
  %p57 = pneg %p56
  %59 = shalt.err (%p57)

</llo_original>
